<compile_context>
chip_gen: v7x
topology: tpu7x:2x2x1
jax: 0.10.0
libtpu: 0.0.40
codegen_flags: <defaults>
</compile_context>

<pallas_src>
import functools

import jax
import jax.numpy as jnp
from jax import lax
from jax.experimental import pallas as pl
from jax.experimental.pallas import tpu as pltpu


# ---------------------------------------------------------------------------
# Kernels
# ---------------------------------------------------------------------------

def _rep_pad_fullrow_kernel(x_ref, o_ref, *, L: int, pad: int):
    """Block = (TR, L) in, (TR, L + pad) out.  Two stores: the body store is a
    pure vld->vst stream; only the small tail store is lane-masked."""
    o_ref[:, :L] = x_ref[...]
    o_ref[:, L:] = jnp.broadcast_to(x_ref[:, L - 1:L], (o_ref.shape[0], pad))


def _rep_pad_coltile_kernel(x_ref, o_ref, *, L: int, TC: int, local_last: int):
    """2-D (row, col) tiled variant for very long sequences.

    Output column tile j covers global columns [j*TC, (j+1)*TC).  The input
    index_map clamps to the last input column tile for pure-tail blocks, so
    the replicated value (global column L-1) always sits at the *static*
    local lane offset `local_last` of the fetched input tile."""
    j = pl.program_id(1)
    x = x_ref[...]                                     # (TR, TC)
    last = x[:, local_last:local_last + 1]             # (TR, 1), static slice
    cols = j * TC + lax.broadcasted_iota(jnp.int32, x.shape, 1)
    o_ref[...] = jnp.where(cols < L, x, last)


# ---------------------------------------------------------------------------
# Tiling helpers
# ---------------------------------------------------------------------------

def _round_up(n: int, m: int) -> int:
    return ((n + m - 1) // m) * m


def _vmem_budget():
    """(per-block double-buffered in+out byte budget, vmem_limit_bytes),
    gated by this generation's physical VMEM (64 MiB/TC v7x, 128 MiB v5e/v6e)."""
    try:
        cap = int(pltpu.get_tpu_info().vmem_capacity_bytes)
    except Exception:  # off-TPU tracing / older runtimes: assume the small chip
        cap = 64 * 1024 * 1024
    vmem_limit = min(48 * 1024 * 1024, cap // 2)        # 48 MiB v5e/v6e, 32 MiB v7x
    budget = min(24 * 1024 * 1024, (vmem_limit * 3) // 4)
    return budget, vmem_limit


def _row_tile(n_rows: int, bytes_per_row: int, sublane: int, budget: int) -> int:
    tr = max(sublane, (budget // max(bytes_per_row, 1)) // sublane * sublane)
    # Keep the "parallel" row axis at >= 2 grid steps so both v7x TensorCores
    # pull HBM; never exceed the sublane-rounded row count.
    tr = min(tr,
             _round_up(pl.cdiv(n_rows, 2), sublane),
             _round_up(n_rows, sublane))
    return max(tr, sublane)


# ---------------------------------------------------------------------------
# Pallas dispatch on the collapsed (R, L) slab
# ---------------------------------------------------------------------------

def _pad2d_pallas(x2d: jax.Array, pad: int, *, budget: int, vmem_limit: int) -> jax.Array:
    R, L = x2d.shape
    Lp = L + pad
    itemsize = x2d.dtype.itemsize
    sublane = max(8, 32 // itemsize)                    # 8 f32 / 16 bf16 / 32 int8

    bytes_per_row = 2 * (L + Lp) * itemsize             # double-buffered in+out / row

    if sublane * bytes_per_row <= budget:
        # -------- 1-D row-tiled path: each block spans the full time axis ----
        TR = _row_tile(R, bytes_per_row, sublane, budget)
        kernel = functools.partial(_rep_pad_fullrow_kernel, L=L, pad=pad)
        return pl.pallas_call(
            kernel,
            out_shape=jax.ShapeDtypeStruct((R, Lp), x2d.dtype),
            grid=(pl.cdiv(R, TR),),       # uneven grid: ragged last block is masked
            in_specs=[pl.BlockSpec((TR, L), lambda i: (i, 0))],
            out_specs=pl.BlockSpec((TR, Lp), lambda i: (i, 0)),
            compiler_params=pltpu.CompilerParams(
                dimension_semantics=("parallel",),
                vmem_limit_bytes=vmem_limit,
            ),
        )(x2d)

    # -------- 2-D (row, col) tiled path for very long sequences --------------
    lane = 128
    TC = (budget // (4 * sublane * itemsize)) // lane * lane
    TC = max(lane, min(TC, 32 * 1024))
    TR = _row_tile(R, 4 * TC * itemsize, sublane, budget)
    n_in = pl.cdiv(L, TC)                               # input column tiles
    local_last = (L - 1) - (n_in - 1) * TC              # static local lane of col L-1
    kernel = functools.partial(_rep_pad_coltile_kernel, L=L, TC=TC, local_last=local_last)
    return pl.pallas_call(
        kernel,
        out_shape=jax.ShapeDtypeStruct((R, Lp), x2d.dtype),
        grid=(pl.cdiv(R, TR), pl.cdiv(Lp, TC)),
        in_specs=[pl.BlockSpec((TR, TC), lambda i, j: (i, jnp.minimum(j, n_in - 1)))],
        out_specs=pl.BlockSpec((TR, TC), lambda i, j: (i, j)),
        compiler_params=pltpu.CompilerParams(
            dimension_semantics=("parallel", "arbitrary"),
            vmem_limit_bytes=vmem_limit,
        ),
    )(x2d)


# ---------------------------------------------------------------------------
# Public wrapper (matches the PyTorch module's forward)
# ---------------------------------------------------------------------------

@functools.partial(jax.jit, static_argnames=("padding", "force_pallas"))
def replication_pad1d(x: jax.Array, padding, force_pallas: bool = False) -> jax.Array:
    """Replicate the last time-step padding[-1] times on the right.  The left
    entry of `padding` is ignored, exactly as in the reference forward()."""
    pad = int(padding if isinstance(padding, int) else padding[-1])
    if pad < 0:
        raise ValueError("replication_pad1d: negative (cropping) padding is not supported")
    B, C, L = x.shape
    if pad == 0:
        return x
    Lp = L + pad

    # Tiny problems: fixed pallas_call launch/pipeline overhead dominates,
    # let XLA's fused copy handle it.
    total_bytes = B * C * (L + Lp) * x.dtype.itemsize
    if not force_pallas and total_bytes < 512 * 1024:
        tail = jnp.broadcast_to(x[:, :, -1:], (B, C, pad))
        return jnp.concatenate([x, tail], axis=-1)

    # TODO(synk): for narrow Lp (<128 lanes) a lane-packed / transposed layout
    # would avoid masked tail stores, but only pays off if neighboring ops
    # already produce/consume that layout (no extra HBM pass).
    budget, vmem_limit = _vmem_budget()
    out2d = _pad2d_pallas(x.reshape(B * C, L), pad, budget=budget, vmem_limit=vmem_limit)
    return out2d.reshape(B, C, Lp)


# ---------------------------------------------------------------------------
# Self-test
# ---------------------------------------------------------------------------

if __name__ == "__main__":
    root = jax.random.PRNGKey(0)
    k1, k2, k3 = jax.random.split(root, 3)

    def ref_pad3d(x, pad):
        tail = jnp.repeat(x[:, :, -1:], pad, axis=-1)
        return jnp.concatenate([x, tail], axis=-1)

    # 1) Primary small example, forced through the Pallas row-tiled path.
    B, C, L = 2, 4, 16
    padding = (0, 8)
    x = jax.random.normal(k1, (B, C, L), dtype=jnp.float32)
    out = jax.block_until_ready(replication_pad1d(x, padding, force_pallas=True))
    assert out.shape == (B, C, L + padding[-1]), out.shape
    assert jnp.allclose(out, ref_pad3d(x, padding[-1])), "mismatch (row-tiled path)"

    # Default dispatch (small-problem fallback) must agree as well.
    out_fb = jax.block_until_ready(replication_pad1d(x, padding))
    assert jnp.allclose(out_fb, ref_pad3d(x, padding[-1])), "mismatch (fallback path)"

    # 2) Ragged row count (R = 15, not a sublane multiple): exercises the
    #    uneven-grid masked writeback that replaced the jnp.pad/slice path.
    x2 = jax.random.normal(k2, (3, 5, 16), dtype=jnp.float32)
    out2 = jax.block_until_ready(replication_pad1d(x2, (0, 8), force_pallas=True))
    assert jnp.allclose(out2, ref_pad3d(x2, 8)), "mismatch (ragged rows)"

    # 3) Column-tiled (2-D grid) path, forced with a tiny budget: exercises
    #    body, straddling, and pure-tail column tiles.
    x3 = jax.random.normal(k3, (16, 380), dtype=jnp.float32)
    out3 = jax.block_until_ready(
        _pad2d_pallas(x3, 8, budget=16 * 1024, vmem_limit=32 * 1024 * 1024))
    ref3 = jnp.concatenate([x3, jnp.broadcast_to(x3[:, -1:], (16, 8))], axis=-1)
    assert jnp.allclose(out3, ref3), "mismatch (column-tiled path)"

    print("KERNEL_OK")
</pallas_src>

<mosaic_0001>
module attributes {stable_mosaic.version = 11 : i64} {
  func.func @_rep_pad_fullrow_kernel(%arg0: i32, %arg1: memref<8x16xf32, #tpu.memory_space<vmem>>, %arg2: memref<8x24xf32, #tpu.memory_space<vmem>>) attributes {dimension_semantics = [#tpu.dimension_semantics<parallel>], iteration_bounds = array<i64: 1>, scalar_prefetch = 0 : i64, scratch_operands = 0 : i64, tpu.core_type = #tpu.core_type<tc>, window_params = [{transform_indices = @transform_0, window_bounds = array<i64: 8, 16>}, {transform_indices = @transform_1, window_bounds = array<i64: 8, 24>}]} {
    %c0 = arith.constant 0 : index
    %c0_0 = arith.constant 0 : index
    %0 = vector.load %arg1[%c0, %c0_0] : memref<8x16xf32, #tpu.memory_space<vmem>>, vector<8x16xf32>
    %c0_1 = arith.constant 0 : index
    %c0_2 = arith.constant 0 : index
    %1 = vector.load %arg2[%c0_1, %c0_2] : memref<8x24xf32, #tpu.memory_space<vmem>>, vector<8x16xf32>
    tpu.vector_store %arg2[%c0_1, %c0_2], %0 {strides = array<i32>} : memref<8x24xf32, #tpu.memory_space<vmem>>, vector<8x16xf32>,
    %c0_3 = arith.constant 0 : index
    %c15 = arith.constant 15 : index
    %2 = vector.load %arg1[%c0_3, %c15] : memref<8x16xf32, #tpu.memory_space<vmem>>, vector<8x1xf32>
    %3 = vector.shape_cast %2 : vector<8x1xf32> to vector<8x1xf32>
    %4 = vector.broadcast %3 : vector<8x1xf32> to vector<8x8xf32>
    %c0_4 = arith.constant 0 : index
    %c16 = arith.constant 16 : index
    %5 = vector.load %arg2[%c0_4, %c16] : memref<8x24xf32, #tpu.memory_space<vmem>>, vector<8x8xf32>
    tpu.vector_store %arg2[%c0_4, %c16], %4 {strides = array<i32>} : memref<8x24xf32, #tpu.memory_space<vmem>>, vector<8x8xf32>,
    return
  }
  func.func @transform_0(%arg0: i32) -> (i32, i32) {
    %c0_i32 = arith.constant 0 : i32
    %c0_i32_0 = arith.constant 0 : i32
    return %arg0, %c0_i32 : i32, i32
  }
  func.func @transform_1(%arg0: i32) -> (i32, i32) {
    %c0_i32 = arith.constant 0 : i32
    %c0_i32_0 = arith.constant 0 : i32
    return %arg0, %c0_i32 : i32, i32
  }
}

</mosaic_0001>

<llo_original>
// kernel: replication_pad1d.1
$region0: #{replication_pad1d.1}
  #allocation0 [shape = 'u32[]', space=smem, size = 0x4, offset = 0x4, fixed_abs, tag = 'smem constant byte address 0x4 - core index']
  #allocation1 [shape = 'u32[144,128]{1,0:T(1,128)}', space=vmem, size = 0x12000, scoped, tag = 'internal scratch']
  %s0 = inlined_call_operand.hbm [shape: f32[8,16], index: 0, kind: input, shape index: {}]
  %s1 = inlined_call_operand.hbm [shape: f32[8,24], index: 1, kind: output, shape index: {}]
  %s2 = sld [smem:[#allocation0]]
  $region18: #{replication_pad1d.1} parent=0
    _
  %s4 = ssub.s32 1, %s2
  %s5 = scalar_select 0, %s4, %s2
  $region1: #{replication_pad1d.1} parent=0
    #allocation2 [shape = 'u8[4096]{0}', space=vmem, size = 0x1000, scoped, tag = 'input window, operand 0, single buffered']
    #allocation3 [shape = 's32[1]{0}', space=sflag, size = 0x4, scoped, tag = 'scoped memory for replication_pad1d.1']
    #allocation4 [shape = 's32[1]{0}', space=sflag, size = 0x4, scoped, tag = 'scoped memory for replication_pad1d.1']
    #allocation5 [shape = 'u8[4096]{0}', space=vmem, size = 0x1000, scoped, tag = 'output window, operand 0, single buffered']
    %6 = vsyncpa [#allocation3], 0
    %7 = vsyncpa [#allocation4], 0
    // Predicated region
    $region2: #{replication_pad1d.1} parent=1 // pred_check
      _
    $region3: #{replication_pad1d.1} parent=1 // pred_check_branch
      %9 = sbr.rel (0) target = $region5
    $region4: #{replication_pad1d.1} parent=1 // pred_region
      %s11 = ssub.s32 128, 128
      %12 = vsyncadd [#allocation3], %s11
      %s14 = sshll.u32 [#allocation2], 4
      %s15 = int_to_ptr.vmem [resolvable:$true] %s14
      %17 = dma.hbm_to_vmem [thread:$0]  %s0, 128, %s15, [#allocation3]
    $region5: #{replication_pad1d.1} parent=1 // pred_fallthru
      _
    // Predicated region
    $region6: #{replication_pad1d.1} parent=1 // pred_check
      _
    $region7: #{replication_pad1d.1} parent=1 // pred_check_branch
      %19 = sbr.rel (0) target = $region9
    $region8: #{replication_pad1d.1} parent=1 // pred_region
      %20 = dma.done [#allocation3], 128
    $region9: #{replication_pad1d.1} parent=1 // pred_fallthru
      _
    %v21 = vld [vmem:[#allocation2] sm:$0xff]
    %vm22 = vcmask 130048
    %23 = vst.msk [vmem:[#allocation5] sm:$0xff] %vm22, %v21
    %v24 = vld [vmem:[#allocation2] sm:$0xff]
    %26 = vset.pattern.permute.xlu0 15
    %27 = vperm.xlu0 %26, %v24
    %v28 = vpop.permute.xlu0 %27
    %vm30 = vcmask 195712
    %31 = vst.msk [vmem:[#allocation5] sm:$0xff] %vm30, %v28
    // Predicated region
    $region10: #{replication_pad1d.1} parent=1 // pred_check
      _
    $region11: #{replication_pad1d.1} parent=1 // pred_check_branch
      %33 = sbr.rel (0) target = $region13
    $region12: #{replication_pad1d.1} parent=1 // pred_region
      %s35 = ssub.s32 128, 128
      %36 = vsyncadd [#allocation4], %s35
      %s38 = sshll.u32 [#allocation5], 4
      %s39 = int_to_ptr.vmem [resolvable:$true] %s38
      %41 = dma.vmem_to_hbm [thread:$0]  %s39, 128, %s1, [#allocation4]
    $region13: #{replication_pad1d.1} parent=1 // pred_fallthru
      _
    // Predicated region
    $region14: #{replication_pad1d.1} parent=1 // pred_check
      _
    $region15: #{replication_pad1d.1} parent=1 // pred_check_branch
      %43 = sbr.rel (0) target = $region17
    $region16: #{replication_pad1d.1} parent=1 // pred_region
      %44 = dma.done [#allocation4], 128
    $region17: #{replication_pad1d.1} parent=1 // pred_fallthru
      _
    %45 = vsyncpa [#allocation3], 1
    %46 = vsyncpa [#allocation4], 1

</llo_original>
